<compile_context>
chip_gen: v5e
topology: v5e:2x2
jax: 0.10.0
libtpu: 0.0.40
codegen_flags: <defaults>
</compile_context>

<pallas_src>
import jax
import jax.numpy as jnp
from jax.experimental import pallas as pl
from jax.experimental.pallas import tpu as pltpu


def mlp_kernel(x_ref, wc_ref, bc_ref, o_ref):
    # Single collapsed linear: (TB, 64) @ (64, 2) + (1, 2), then ReLU.
    h = jnp.dot(x_ref[...], wc_ref[...], preferred_element_type=jnp.float32)
    o_ref[...] = jnp.maximum(h + bc_ref[...], 0.0).astype(o_ref.dtype)


def _collapse_params(params):
    """Collapse fc1.fc2.fc3 (no intermediate nonlinearity) into one affine map."""
    w1, b1 = params["w1"], params["b1"]
    w2, b2 = params["w2"], params["b2"]
    w3, b3 = params["w3"], params["b3"]
    wc = w1 @ w2 @ w3                      # (64, 2)
    bc = b1 @ w2 @ w3 + b2 @ w3 + b3       # (1, 2)
    return wc, bc


def model_network_forward(x, params):
    """x: (B, 64) float32. params: dict of transposed weights / biases."""
    wc, bc = _collapse_params(params)

    B, D = x.shape
    N = wc.shape[1]
    MAX_TB = 1024  # 1024x64 f32 tile = 256 KiB; double-buffered well under VMEM.

    if B <= MAX_TB:
        # One block covering the whole array: block dims == array dims, so the
        # (8,128) divisibility rule does not apply and no padding copy is made.
        TB, Bp = B, B
        x_in = x
    else:
        TB = MAX_TB
        Bp = ((B + TB - 1) // TB) * TB
        x_in = jnp.pad(x, ((0, Bp - B), (0, 0))) if Bp != B else x

    grid = (Bp // TB,)
    out = pl.pallas_call(
        mlp_kernel,
        out_shape=jax.ShapeDtypeStruct((Bp, N), jnp.float32),
        grid=grid,
        in_specs=[
            pl.BlockSpec((TB, D), lambda i: (i, 0)),   # x tile, pipelined
            pl.BlockSpec((D, N), lambda i: (0, 0)),    # collapsed W, resident
            pl.BlockSpec((1, N), lambda i: (0, 0)),    # collapsed b, resident
        ],
        out_specs=pl.BlockSpec((TB, N), lambda i: (i, 0)),
        compiler_params=pltpu.CompilerParams(
            dimension_semantics=("parallel",)),        # megacore on v7x
    )(x_in, wc, bc)
    return out[:B] if Bp != B else out


def init_params(key):
    """Deterministic init mimicking PyTorch nn.Linear default (uniform +/- 1/sqrt(fan_in)).
    Weights are stored already transposed to (in, out)."""
    dims = [(64, 32), (32, 16), (16, 2)]
    params = {}
    for i, (fan_in, fan_out) in enumerate(dims, start=1):
        key, kw, kb = jax.random.split(key, 3)
        bound = 1.0 / jnp.sqrt(jnp.float32(fan_in))
        w = jax.random.uniform(kw, (fan_in, fan_out), jnp.float32, -bound, bound)
        b = jax.random.uniform(kb, (1, fan_out), jnp.float32, -bound, bound)
        params[f"w{i}"] = w
        params[f"b{i}"] = b
    return params


def reference_forward(x, params):
    """Un-collapsed reference matching the PyTorch module exactly."""
    h = x @ params["w1"] + params["b1"]
    h = h @ params["w2"] + params["b2"]
    h = h @ params["w3"] + params["b3"]
    return jnp.maximum(h, 0.0)


if __name__ == "__main__":
    key = jax.random.PRNGKey(0)
    key, kx = jax.random.split(key)
    B = 8  # small batch
    x = jax.random.normal(kx, (B, 64), jnp.float32)

    params = init_params(key)

    out = model_network_forward(x, params)
    out = jax.block_until_ready(out)

    ref = reference_forward(x, params)
    assert out.shape == (B, 2), out.shape
    assert jnp.allclose(out, ref, atol=1e-5, rtol=1e-5), "mismatch vs reference"

    print("KERNEL_OK")
</pallas_src>

<mosaic_0001>
module attributes {stable_mosaic.version = 11 : i64} {
  func.func @mlp_kernel(%arg0: i32, %arg1: memref<8x64xf32, #tpu.memory_space<vmem>>, %arg2: memref<64x2xf32, #tpu.memory_space<vmem>>, %arg3: memref<1x2xf32, #tpu.memory_space<vmem>>, %arg4: memref<8x2xf32, #tpu.memory_space<vmem>>) attributes {dimension_semantics = [#tpu.dimension_semantics<parallel>], iteration_bounds = array<i64: 1>, scalar_prefetch = 0 : i64, scratch_operands = 0 : i64, tpu.core_type = #tpu.core_type<tc>, window_params = [{transform_indices = @transform_0, window_bounds = array<i64: 8, 64>}, {pipeline_mode = #tpu.pipeline_mode<synchronous>, transform_indices = @transform_1, window_bounds = array<i64: 64, 2>}, {pipeline_mode = #tpu.pipeline_mode<synchronous>, transform_indices = @transform_2, window_bounds = array<i64: 1, 2>}, {transform_indices = @transform_3, window_bounds = array<i64: 8, 2>}]} {
    %c0 = arith.constant 0 : index
    %c0_0 = arith.constant 0 : index
    %0 = vector.load %arg1[%c0, %c0_0] : memref<8x64xf32, #tpu.memory_space<vmem>>, vector<8x64xf32>
    %c0_1 = arith.constant 0 : index
    %c0_2 = arith.constant 0 : index
    %1 = vector.load %arg2[%c0_1, %c0_2] : memref<64x2xf32, #tpu.memory_space<vmem>>, vector<64x2xf32>
    %cst = arith.constant dense<0.000000e+00> : vector<8x2xf32>
    %2 = tpu.matmul %0, %1, %cst {dimension_numbers = #tpu.dot_dimension_numbers<[1], [0], [0], [1], [0, 0, 1, 1], [], []>} : vector<8x64xf32>, vector<64x2xf32>, vector<8x2xf32> -> vector<8x2xf32>
    %c0_3 = arith.constant 0 : index
    %c0_4 = arith.constant 0 : index
    %3 = vector.load %arg3[%c0_3, %c0_4] : memref<1x2xf32, #tpu.memory_space<vmem>>, vector<1x2xf32>
    %4 = vector.broadcast %3 : vector<1x2xf32> to vector<8x2xf32>
    %5 = arith.addf %2, %4 : vector<8x2xf32>
    %cst_5 = arith.constant 0.000000e+00 : f32
    %6 = vector.broadcast %cst_5 : f32 to vector<8x2xf32>
    %7 = arith.maximumf %5, %6 : vector<8x2xf32>
    %c0_6 = arith.constant 0 : index
    %c0_7 = arith.constant 0 : index
    %8 = vector.load %arg4[%c0_6, %c0_7] : memref<8x2xf32, #tpu.memory_space<vmem>>, vector<8x2xf32>
    tpu.vector_store %arg4[%c0_6, %c0_7], %7 {strides = array<i32>} : memref<8x2xf32, #tpu.memory_space<vmem>>, vector<8x2xf32>,
    return
  }
  func.func @transform_0(%arg0: i32) -> (i32, i32) {
    %c0_i32 = arith.constant 0 : i32
    %c0_i32_0 = arith.constant 0 : i32
    return %arg0, %c0_i32 : i32, i32
  }
  func.func @transform_1(%arg0: i32) -> (i32, i32) {
    %c0_i32 = arith.constant 0 : i32
    %c0_i32_0 = arith.constant 0 : i32
    %c0_i32_1 = arith.constant 0 : i32
    return %c0_i32, %c0_i32_0 : i32, i32
  }
  func.func @transform_2(%arg0: i32) -> (i32, i32) {
    %c0_i32 = arith.constant 0 : i32
    %c0_i32_0 = arith.constant 0 : i32
    %c0_i32_1 = arith.constant 0 : i32
    return %c0_i32, %c0_i32_0 : i32, i32
  }
  func.func @transform_3(%arg0: i32) -> (i32, i32) {
    %c0_i32 = arith.constant 0 : i32
    %c0_i32_0 = arith.constant 0 : i32
    return %arg0, %c0_i32 : i32, i32
  }
}

</mosaic_0001>

<llo_original>
// kernel: tpu_custom_call.1
$region0: #{tpu_custom_call.1}
  #allocation0 [shape = 'u32[]', space=smem, size = 0x4, offset = 0x4, fixed_abs, tag = 'smem constant byte address 0x4 - core index']
  #allocation1 [shape = 'u32[72,128]{1,0:T(1,128)}', space=vmem, size = 0x9000, scoped, tag = 'internal scratch']
  %s0 = inlined_call_operand.vmem [shape: f32[8,64], index: 0, kind: input, shape index: {}]
  %s1 = inlined_call_operand.vmem [shape: f32[64,2], index: 1, kind: input, shape index: {}]
  %s2 = inlined_call_operand.vmem [shape: f32[1,2], index: 2, kind: input, shape index: {}]
  %s3 = inlined_call_operand.vmem [shape: f32[8,2], index: 3, kind: output, shape index: {}]
  %s4 = sld [smem:[#allocation0]]
  $region22: #{tpu_custom_call.1} parent=0
    _
  %s6 = ssub.s32 1, %s4
  %s7 = scalar_select 0, %s6, %s4
  // Predicated region
  $region2: #{tpu_custom_call.1} parent=0 // pred_check
    _
  $region3: #{tpu_custom_call.1} parent=0 // pred_check_branch
    %9 = sbr.rel (0) target = $region5
  $region4: #{tpu_custom_call.1} parent=0 // pred_region
    _
  $region5: #{tpu_custom_call.1} parent=0 // pred_fallthru
    _
  // Predicated region
  $region6: #{tpu_custom_call.1} parent=0 // pred_check
    _
  $region7: #{tpu_custom_call.1} parent=0 // pred_check_branch
    %11 = sbr.rel (0) target = $region9
  $region8: #{tpu_custom_call.1} parent=0 // pred_region
    _
  $region9: #{tpu_custom_call.1} parent=0 // pred_fallthru
    _
  // Predicated region
  $region10: #{tpu_custom_call.1} parent=0 // pred_check
    _
  $region11: #{tpu_custom_call.1} parent=0 // pred_check_branch
    %13 = sbr.rel (0) target = $region13
  $region12: #{tpu_custom_call.1} parent=0 // pred_region
    _
  $region13: #{tpu_custom_call.1} parent=0 // pred_fallthru
    _
  %v14 = vld [vmem:[%s0] sm:$0xff]
  %v15 = vld [vmem:[%s1] sm:$0xff]
  %v16 = vld [vmem:[%s1 + $0x8] sm:$0xff]
  %v17 = vld [vmem:[%s1 + $0x10] sm:$0xff]
  %v18 = vld [vmem:[%s1 + $0x18] sm:$0xff]
  %v19 = vld [vmem:[%s1 + $0x20] sm:$0xff]
  %v20 = vld [vmem:[%s1 + $0x28] sm:$0xff]
  %v21 = vld [vmem:[%s1 + $0x30] sm:$0xff]
  %v22 = vld [vmem:[%s1 + $0x38] sm:$0xff]
  %v23 = vld [vmem:[%s2] sm:$0x1]
  %v25 = vperm.slane %v23, 0
  %vm27 = vcmask 523264
  %v29 = vsel %vm27, %v14, 0
  %31 = vmatpush.msra.mxu0 0.0
  %32 = vmatpush.msra.mxu0 0.0
  %33 = vmatpush.msra.mxu0 0.0
  %34 = vmatpush.msra.mxu0 0.0
  %35 = vmatpush.msra.mxu0 0.0
  %36 = vmatpush.msra.mxu0 0.0
  %37 = vmatpush.msra.mxu0 0.0
  %38 = vmatpush.msra.mxu0 0.0
  %39 = vmatpush.msra.mxu0 %v22
  %40 = vmatpush.msra.mxu0 %v21
  %41 = vmatpush.msra.mxu0 %v20
  %42 = vmatpush.msra.mxu0 %v19
  %43 = vmatpush.msra.mxu0 %v18
  %44 = vmatpush.msra.mxu0 %v17
  %45 = vmatpush.msra.mxu0 %v16
  %46 = vmatpush.msra.mxu0 %v15
  %47 = vmatmul.f32.gmra.mxu0 %v29
  %v48 = vpop.f32.mrf.mxu0
  %v49 = vadd.f32 %v25, %v48
  %50 = vdwg.mxu0
  %v51 = vmax.f32 %v49, 0.0
  %vm52 = vcmask 15360
  %53 = vst.msk [vmem:[%s3] sm:$0xff] %vm52, %v51
  // Predicated region
  $region14: #{tpu_custom_call.1} parent=0 // pred_check
    _
  $region15: #{tpu_custom_call.1} parent=0 // pred_check_branch
    %55 = sbr.rel (0) target = $region17
  $region16: #{tpu_custom_call.1} parent=0 // pred_region
    _
  $region17: #{tpu_custom_call.1} parent=0 // pred_fallthru
    _
  // Predicated region
  $region18: #{tpu_custom_call.1} parent=0 // pred_check
    _
  $region19: #{tpu_custom_call.1} parent=0 // pred_check_branch
    %57 = sbr.rel (0) target = $region21
  $region20: #{tpu_custom_call.1} parent=0 // pred_region
    _
  $region21: #{tpu_custom_call.1} parent=0 // pred_fallthru
    _

</llo_original>
